<compile_context>
chip_gen: v7x
topology: tpu7x:2x2x1
jax: 0.10.0
libtpu: 0.0.40
codegen_flags: <defaults>
</compile_context>

<pallas_src>
import functools

import jax
import jax.numpy as jnp
from jax.experimental import pallas as pl
from jax.experimental.pallas import tpu as pltpu


def _round_up(x, m):
    return (x + m - 1) // m * m


def _ae_kernel(x_ref, w_enc_ref, b_enc_ref, w_dec_ref, b_dec_ref, out_ref,
               *, compute_dtype):
    """Fused encoder (Linear+ReLU) + decoder (Linear) on a (TM, D) batch tile."""
    x = x_ref[...].astype(compute_dtype)                       # [TM, D]
    w_enc = w_enc_ref[...].astype(compute_dtype)                # [D, Hp]
    h = jnp.dot(x, w_enc, preferred_element_type=jnp.float32)   # [TM, Hp] f32
    h = jnp.maximum(h + b_enc_ref[...], 0.0)                    # bias + ReLU (f32)

    w_dec = w_dec_ref[...].astype(compute_dtype)                # [Hp, D]
    y = jnp.dot(h.astype(compute_dtype), w_dec,
                preferred_element_type=jnp.float32)             # [TM, D] f32
    y = y + b_dec_ref[...]
    out_ref[...] = y.astype(out_ref.dtype)


def autoencoder_forward(x_nchw, w_enc, b_enc, w_dec, b_dec, *,
                        tm_max=256, compute_dtype=jnp.float32):
    """x_nchw: [B, C, H, W] float32. Returns reconstruction with same shape."""
    B, C, H, W = x_nchw.shape
    D = C * H * W
    HID = w_enc.shape[1]

    # Lane/sublane-aligned padded sizes.
    D_pad = _round_up(D, 128)
    H_pad = _round_up(HID, 128)
    B8 = _round_up(B, 8)
    TM = min(tm_max, B8)           # batch tile (>= 8, <= tm_max)
    B_pad = _round_up(B8, TM)      # so the batch grid divides evenly

    # Zero-pad: extra hidden units get zero weight + zero bias -> ReLU(0)=0 and
    # contribute nothing through the (zero-padded) decoder rows; extra D columns
    # of x / w_enc rows are zero, and extra decoder output columns are sliced off.
    x_flat = x_nchw.reshape(B, D)
    x_p = jnp.pad(x_flat, ((0, B_pad - B), (0, D_pad - D)))
    w_enc_p = jnp.pad(w_enc, ((0, D_pad - D), (0, H_pad - HID)))
    b_enc_p = jnp.pad(b_enc, (0, H_pad - HID)).reshape(1, H_pad)
    w_dec_p = jnp.pad(w_dec, ((0, H_pad - HID), (0, D_pad - D)))
    b_dec_p = jnp.pad(b_dec, (0, D_pad - D)).reshape(1, D_pad)

    grid = (B_pad // TM,)
    kernel = functools.partial(_ae_kernel, compute_dtype=compute_dtype)

    out_p = pl.pallas_call(
        kernel,
        out_shape=jax.ShapeDtypeStruct((B_pad, D_pad), x_flat.dtype),
        grid_spec=pltpu.PrefetchScalarGridSpec(
            num_scalar_prefetch=0,
            grid=grid,
            in_specs=[
                # Activations: tiled over batch, double-buffered by Pallas.
                pl.BlockSpec((TM, D_pad), lambda i: (i, 0)),
                # Weights / biases: constant index_map -> resident across tiles.
                pl.BlockSpec((D_pad, H_pad), lambda i: (0, 0)),
                pl.BlockSpec((1, H_pad), lambda i: (0, 0)),
                pl.BlockSpec((H_pad, D_pad), lambda i: (0, 0)),
                pl.BlockSpec((1, D_pad), lambda i: (0, 0)),
            ],
            out_specs=pl.BlockSpec((TM, D_pad), lambda i: (i, 0)),
        ),
        compiler_params=pltpu.CompilerParams(
            dimension_semantics=("parallel",),   # megacore sharding on v7x
            vmem_limit_bytes=32 * 1024 * 1024,
        ),
    )(x_p, w_enc_p, b_enc_p, w_dec_p, b_dec_p)

    return out_p[:B, :D].reshape(B, C, H, W)


def init_params(key, in_dim, hidden_dim):
    """Deterministic parameter init (PyTorch nn.Linear-style uniform)."""
    k1, k2, k3, k4 = jax.random.split(key, 4)
    lim_enc = 1.0 / jnp.sqrt(in_dim)
    lim_dec = 1.0 / jnp.sqrt(hidden_dim)
    w_enc = jax.random.uniform(k1, (in_dim, hidden_dim), jnp.float32,
                               -lim_enc, lim_enc)
    b_enc = jax.random.uniform(k2, (hidden_dim,), jnp.float32,
                               -lim_enc, lim_enc)
    w_dec = jax.random.uniform(k3, (hidden_dim, in_dim), jnp.float32,
                               -lim_dec, lim_dec)
    b_dec = jax.random.uniform(k4, (in_dim,), jnp.float32,
                               -lim_dec, lim_dec)
    return w_enc, b_enc, w_dec, b_dec


if __name__ == "__main__":
    B, C, H, W = 2, 4, 16, 16
    HIDDEN = 32
    D = C * H * W

    key = jax.random.PRNGKey(0)
    kx, kp = jax.random.split(key)
    x = jax.random.normal(kx, (B, C, H, W), jnp.float32)
    w_enc, b_enc, w_dec, b_dec = init_params(kp, D, HIDDEN)

    # Pure-JAX reference of the same semantics.
    x_flat = x.reshape(B, D)
    h_ref = jnp.maximum(x_flat @ w_enc + b_enc, 0.0)
    y_ref = (h_ref @ w_dec + b_dec).reshape(B, C, H, W)

    # f32 compute path (exact match to reference).
    out = autoencoder_forward(x, w_enc, b_enc, w_dec, b_dec)
    out = jax.block_until_ready(out)
    assert out.shape == (B, C, H, W)
    assert jnp.allclose(out, y_ref, atol=1e-5, rtol=1e-5)

    # bf16 MXU compute path (f32 accumulation), loose tolerance.
    out_bf16 = autoencoder_forward(x, w_enc, b_enc, w_dec, b_dec,
                                   compute_dtype=jnp.bfloat16)
    out_bf16 = jax.block_until_ready(out_bf16)
    assert out_bf16.shape == (B, C, H, W)
    assert jnp.allclose(out_bf16, y_ref, atol=5e-2, rtol=5e-2)

    print("KERNEL_OK")
</pallas_src>

<mosaic_0001>
module attributes {stable_mosaic.version = 11 : i64} {
  func.func @_ae_kernel(%arg0: i32, %arg1: memref<8x1024xf32, #tpu.memory_space<vmem>>, %arg2: memref<1024x128xf32, #tpu.memory_space<vmem>>, %arg3: memref<1x128xf32, #tpu.memory_space<vmem>>, %arg4: memref<128x1024xf32, #tpu.memory_space<vmem>>, %arg5: memref<1x1024xf32, #tpu.memory_space<vmem>>, %arg6: memref<8x1024xf32, #tpu.memory_space<vmem>>) attributes {dimension_semantics = [#tpu.dimension_semantics<parallel>], iteration_bounds = array<i64: 1>, scalar_prefetch = 0 : i64, scratch_operands = 0 : i64, tpu.core_type = #tpu.core_type<tc>, window_params = [{transform_indices = @transform_0, window_bounds = array<i64: 8, 1024>}, {pipeline_mode = #tpu.pipeline_mode<synchronous>, transform_indices = @transform_1, window_bounds = array<i64: 1024, 128>}, {pipeline_mode = #tpu.pipeline_mode<synchronous>, transform_indices = @transform_2, window_bounds = array<i64: 1, 128>}, {pipeline_mode = #tpu.pipeline_mode<synchronous>, transform_indices = @transform_3, window_bounds = array<i64: 128, 1024>}, {pipeline_mode = #tpu.pipeline_mode<synchronous>, transform_indices = @transform_4, window_bounds = array<i64: 1, 1024>}, {transform_indices = @transform_5, window_bounds = array<i64: 8, 1024>}]} {
    %c0 = arith.constant 0 : index
    %c0_0 = arith.constant 0 : index
    %0 = vector.load %arg1[%c0, %c0_0] : memref<8x1024xf32, #tpu.memory_space<vmem>>, vector<8x1024xf32>
    %c0_1 = arith.constant 0 : index
    %c0_2 = arith.constant 0 : index
    %1 = vector.load %arg2[%c0_1, %c0_2] : memref<1024x128xf32, #tpu.memory_space<vmem>>, vector<1024x128xf32>
    %cst = arith.constant dense<0.000000e+00> : vector<8x128xf32>
    %2 = tpu.matmul %0, %1, %cst {dimension_numbers = #tpu.dot_dimension_numbers<[1], [0], [0], [1], [0, 0, 1, 1], [], []>} : vector<8x1024xf32>, vector<1024x128xf32>, vector<8x128xf32> -> vector<8x128xf32>
    %c0_3 = arith.constant 0 : index
    %c0_4 = arith.constant 0 : index
    %3 = vector.load %arg3[%c0_3, %c0_4] : memref<1x128xf32, #tpu.memory_space<vmem>>, vector<1x128xf32>
    %4 = vector.broadcast %3 : vector<1x128xf32> to vector<8x128xf32>
    %5 = arith.addf %2, %4 : vector<8x128xf32>
    %cst_5 = arith.constant 0.000000e+00 : f32
    %6 = vector.broadcast %cst_5 : f32 to vector<8x128xf32>
    %7 = arith.maximumf %5, %6 : vector<8x128xf32>
    %c0_6 = arith.constant 0 : index
    %c0_7 = arith.constant 0 : index
    %8 = vector.load %arg4[%c0_6, %c0_7] : memref<128x1024xf32, #tpu.memory_space<vmem>>, vector<128x1024xf32>
    %cst_8 = arith.constant dense<0.000000e+00> : vector<8x1024xf32>
    %9 = tpu.matmul %7, %8, %cst_8 {dimension_numbers = #tpu.dot_dimension_numbers<[1], [0], [0], [1], [0, 0, 1, 1], [], []>} : vector<8x128xf32>, vector<128x1024xf32>, vector<8x1024xf32> -> vector<8x1024xf32>
    %c0_9 = arith.constant 0 : index
    %c0_10 = arith.constant 0 : index
    %10 = vector.load %arg5[%c0_9, %c0_10] : memref<1x1024xf32, #tpu.memory_space<vmem>>, vector<1x1024xf32>
    %11 = vector.broadcast %10 : vector<1x1024xf32> to vector<8x1024xf32>
    %12 = arith.addf %9, %11 : vector<8x1024xf32>
    %c0_11 = arith.constant 0 : index
    %c0_12 = arith.constant 0 : index
    %13 = vector.load %arg6[%c0_11, %c0_12] : memref<8x1024xf32, #tpu.memory_space<vmem>>, vector<8x1024xf32>
    tpu.vector_store %arg6[%c0_11, %c0_12], %12 {strides = array<i32>} : memref<8x1024xf32, #tpu.memory_space<vmem>>, vector<8x1024xf32>,
    return
  }
  func.func @transform_0(%arg0: i32) -> (i32, i32) {
    %c0_i32 = arith.constant 0 : i32
    %c0_i32_0 = arith.constant 0 : i32
    return %arg0, %c0_i32 : i32, i32
  }
  func.func @transform_1(%arg0: i32) -> (i32, i32) {
    %c0_i32 = arith.constant 0 : i32
    %c0_i32_0 = arith.constant 0 : i32
    %c0_i32_1 = arith.constant 0 : i32
    return %c0_i32, %c0_i32_0 : i32, i32
  }
  func.func @transform_2(%arg0: i32) -> (i32, i32) {
    %c0_i32 = arith.constant 0 : i32
    %c0_i32_0 = arith.constant 0 : i32
    %c0_i32_1 = arith.constant 0 : i32
    return %c0_i32, %c0_i32_0 : i32, i32
  }
  func.func @transform_3(%arg0: i32) -> (i32, i32) {
    %c0_i32 = arith.constant 0 : i32
    %c0_i32_0 = arith.constant 0 : i32
    %c0_i32_1 = arith.constant 0 : i32
    return %c0_i32, %c0_i32_0 : i32, i32
  }
  func.func @transform_4(%arg0: i32) -> (i32, i32) {
    %c0_i32 = arith.constant 0 : i32
    %c0_i32_0 = arith.constant 0 : i32
    %c0_i32_1 = arith.constant 0 : i32
    return %c0_i32, %c0_i32_0 : i32, i32
  }
  func.func @transform_5(%arg0: i32) -> (i32, i32) {
    %c0_i32 = arith.constant 0 : i32
    %c0_i32_0 = arith.constant 0 : i32
    return %arg0, %c0_i32 : i32, i32
  }
}

</mosaic_0001>

<llo_original>
// kernel: tpu_custom_call.1
$region0: #{tpu_custom_call.1}
  #allocation0 [shape = 'u32[]', space=smem, size = 0x4, offset = 0x4, fixed_abs, tag = 'smem constant byte address 0x4 - core index']
  #allocation1 [shape = 'u32[144,128]{1,0:T(1,128)}', space=vmem, size = 0x12000, scoped, tag = 'internal scratch']
  %s0 = inlined_call_operand.hbm [shape: f32[8,1024], index: 0, kind: input, shape index: {}]
  %s1 = inlined_call_operand.hbm [shape: f32[1024,128], index: 1, kind: input, shape index: {}]
  %s2 = inlined_call_operand.vmem [shape: f32[1,128], index: 2, kind: input, shape index: {}]
  %s3 = inlined_call_operand.hbm [shape: f32[128,1024], index: 3, kind: input, shape index: {}]
  %s4 = inlined_call_operand.vmem [shape: f32[1,1024], index: 4, kind: input, shape index: {}]
  %s5 = inlined_call_operand.hbm [shape: f32[8,1024], index: 5, kind: output, shape index: {}]
  %s6 = sld [smem:[#allocation0]]
  $region42: #{tpu_custom_call.1} parent=0
    _
  %s8 = ssub.s32 1, %s6
  %s9 = scalar_select 0, %s8, %s6
  $region1: #{tpu_custom_call.1} parent=0
    #allocation2 [shape = 'u8[32768]{0}', space=vmem, size = 0x8000, scoped, tag = 'input window, operand 0, single buffered']
    #allocation3 [shape = 's32[1]{0}', space=sflag, size = 0x4, scoped, tag = 'scoped memory for tpu_custom_call.1']
    #allocation4 [shape = 's32[1]{0}', space=sflag, size = 0x4, scoped, tag = 'scoped memory for tpu_custom_call.1']
    #allocation5 [shape = 'u8[524288]{0}', space=vmem, size = 0x80000, scoped, tag = 'input window, operand 1, single buffered']
    #allocation6 [shape = 's32[1]{0}', space=sflag, size = 0x4, scoped, tag = 'scoped memory for tpu_custom_call.1']
    #allocation7 [shape = 'u8[524288]{0}', space=vmem, size = 0x80000, scoped, tag = 'input window, operand 3, single buffered']
    #allocation8 [shape = 'u8[32768]{0}', space=vmem, size = 0x8000, scoped, tag = 'output window, operand 0, single buffered']
    %10 = vsyncpa [#allocation3], 0
    %11 = vsyncpa [#allocation6], 0
    %12 = vsyncpa [#allocation4], 0
    // Predicated region
    $region2: #{tpu_custom_call.1} parent=1 // pred_check
      _
    $region3: #{tpu_custom_call.1} parent=1 // pred_check_branch
      %14 = sbr.rel (0) target = $region5
    $region4: #{tpu_custom_call.1} parent=1 // pred_region
      %s16 = ssub.s32 1024, 1024
      %17 = vsyncadd [#allocation3], %s16
      %s19 = sshll.u32 [#allocation2], 4
      %s20 = int_to_ptr.vmem [resolvable:$true] %s19
      %22 = dma.hbm_to_vmem [thread:$0]  %s0, 1024, %s20, [#allocation3]
    $region5: #{tpu_custom_call.1} parent=1 // pred_fallthru
      _
    // Predicated region
    $region6: #{tpu_custom_call.1} parent=1 // pred_check
      _
    $region7: #{tpu_custom_call.1} parent=1 // pred_check_branch
      %24 = sbr.rel (0) target = $region9
    $region8: #{tpu_custom_call.1} parent=1 // pred_region
      %s26 = ssub.s32 16384, 16384
      %27 = vsyncadd [#allocation6], %s26
      %s28 = sshll.u32 [#allocation5], 4
      %s29 = int_to_ptr.vmem [resolvable:$true] %s28
      %34 = dma.hbm_to_vmem [thread:$0]  %s1, 16384, %s29, [#allocation6], 128, 128, 8
    $region9: #{tpu_custom_call.1} parent=1 // pred_fallthru
      _
    // Predicated region
    $region10: #{tpu_custom_call.1} parent=1 // pred_check
      _
    $region11: #{tpu_custom_call.1} parent=1 // pred_check_branch
      %36 = sbr.rel (0) target = $region13
    $region12: #{tpu_custom_call.1} parent=1 // pred_region
      _
    $region13: #{tpu_custom_call.1} parent=1 // pred_fallthru
      _
    // Predicated region
    $region14: #{tpu_custom_call.1} parent=1 // pred_check
      _
    $region15: #{tpu_custom_call.1} parent=1 // pred_check_branch
      %38 = sbr.rel (0) target = $region17
    $region16: #{tpu_custom_call.1} parent=1 // pred_region
      %s40 = ssub.s32 16384, 16384
      %41 = vsyncadd [#allocation6], %s40
      %s42 = sshll.u32 [#allocation7], 4
      %s43 = int_to_ptr.vmem [resolvable:$true] %s42
      %48 = dma.hbm_to_vmem [thread:$0]  %s3, 16384, %s43, [#allocation6], 1024, 1024, 64
    $region17: #{tpu_custom_call.1} parent=1 // pred_fallthru
      _
    // Predicated region
    $region18: #{tpu_custom_call.1} parent=1 // pred_check
      _
    $region19: #{tpu_custom_call.1} parent=1 // pred_check_branch
      %50 = sbr.rel (0) target = $region21
    $region20: #{tpu_custom_call.1} parent=1 // pred_region
      _
    $region21: #{tpu_custom_call.1} parent=1 // pred_fallthru
      _
    // Predicated region
    $region22: #{tpu_custom_call.1} parent=1 // pred_check
      _
    $region23: #{tpu_custom_call.1} parent=1 // pred_check_branch
      %52 = sbr.rel (0) target = $region25
    $region24: #{tpu_custom_call.1} parent=1 // pred_region
      %53 = dma.done [#allocation3], 1024
    $region25: #{tpu_custom_call.1} parent=1 // pred_fallthru
      _
    // Predicated region
    $region26: #{tpu_custom_call.1} parent=1 // pred_check
      _
    $region27: #{tpu_custom_call.1} parent=1 // pred_check_branch
      %55 = sbr.rel (0) target = $region29
    $region28: #{tpu_custom_call.1} parent=1 // pred_region
      %56 = dma.done [#allocation6], 16384
    $region29: #{tpu_custom_call.1} parent=1 // pred_fallthru
      _
    // Predicated region
    $region30: #{tpu_custom_call.1} parent=1 // pred_check
      _
    $region31: #{tpu_custom_call.1} parent=1 // pred_check_branch
      %58 = sbr.rel (0) target = $region33
    $region32: #{tpu_custom_call.1} parent=1 // pred_region
      %59 = dma.done [#allocation6], 16384
    $region33: #{tpu_custom_call.1} parent=1 // pred_fallthru
      _
    %v60 = vld [vmem:[#allocation2] sm:$0xff]
    %v61 = vld [vmem:[#allocation2 + $0x8] sm:$0xff]
    %v62 = vld [vmem:[#allocation2 + $0x10] sm:$0xff]
    %v63 = vld [vmem:[#allocation2 + $0x18] sm:$0xff]
    %v64 = vld [vmem:[#allocation2 + $0x20] sm:$0xff]
    %v65 = vld [vmem:[#allocation2 + $0x28] sm:$0xff]
    %v66 = vld [vmem:[#allocation2 + $0x30] sm:$0xff]
    %v67 = vld [vmem:[#allocation2 + $0x38] sm:$0xff]
    %v68 = vld [vmem:[#allocation5] sm:$0xff]
    %v69 = vld [vmem:[#allocation5 + $0x8] sm:$0xff]
    %v70 = vld [vmem:[#allocation5 + $0x10] sm:$0xff]
    %v71 = vld [vmem:[#allocation5 + $0x18] sm:$0xff]
    %v72 = vld [vmem:[#allocation5 + $0x20] sm:$0xff]
    %v73 = vld [vmem:[#allocation5 + $0x28] sm:$0xff]
    %v74 = vld [vmem:[#allocation5 + $0x30] sm:$0xff]
    %v75 = vld [vmem:[#allocation5 + $0x38] sm:$0xff]
    %v76 = vld [vmem:[#allocation5 + $0x40] sm:$0xff]
    %v77 = vld [vmem:[#allocation5 + $0x48] sm:$0xff]
    %v78 = vld [vmem:[#allocation5 + $0x50] sm:$0xff]
    %v79 = vld [vmem:[#allocation5 + $0x58] sm:$0xff]
    %v80 = vld [vmem:[#allocation5 + $0x60] sm:$0xff]
    %v81 = vld [vmem:[#allocation5 + $0x68] sm:$0xff]
    %v82 = vld [vmem:[#allocation5 + $0x70] sm:$0xff]
    %v83 = vld [vmem:[#allocation5 + $0x78] sm:$0xff]
    %v84 = vld [vmem:[#allocation5 + $0x80] sm:$0xff]
    %v85 = vld [vmem:[#allocation5 + $0x88] sm:$0xff]
    %v86 = vld [vmem:[#allocation5 + $0x90] sm:$0xff]
    %v87 = vld [vmem:[#allocation5 + $0x98] sm:$0xff]
    %v88 = vld [vmem:[#allocation5 + $0xa0] sm:$0xff]
    %v89 = vld [vmem:[#allocation5 + $0xa8] sm:$0xff]
    %v90 = vld [vmem:[#allocation5 + $0xb0] sm:$0xff]
    %v91 = vld [vmem:[#allocation5 + $0xb8] sm:$0xff]
    %v92 = vld [vmem:[#allocation5 + $0xc0] sm:$0xff]
    %v93 = vld [vmem:[#allocation5 + $0xc8] sm:$0xff]
    %v94 = vld [vmem:[#allocation5 + $0xd0] sm:$0xff]
    %v95 = vld [vmem:[#allocation5 + $0xd8] sm:$0xff]
    %v96 = vld [vmem:[#allocation5 + $0xe0] sm:$0xff]
    %v97 = vld [vmem:[#allocation5 + $0xe8] sm:$0xff]
    %v98 = vld [vmem:[#allocation5 + $0xf0] sm:$0xff]
    %v99 = vld [vmem:[#allocation5 + $0xf8] sm:$0xff]
    %v100 = vld [vmem:[#allocation5 + $0x100] sm:$0xff]
    %v101 = vld [vmem:[#allocation5 + $0x108] sm:$0xff]
    %v102 = vld [vmem:[#allocation5 + $0x110] sm:$0xff]
    %v103 = vld [vmem:[#allocation5 + $0x118] sm:$0xff]
    %v104 = vld [vmem:[#allocation5 + $0x120] sm:$0xff]
    %v105 = vld [vmem:[#allocation5 + $0x128] sm:$0xff]
    %v106 = vld [vmem:[#allocation5 + $0x130] sm:$0xff]
    %v107 = vld [vmem:[#allocation5 + $0x138] sm:$0xff]
    %v108 = vld [vmem:[#allocation5 + $0x140] sm:$0xff]
    %v109 = vld [vmem:[#allocation5 + $0x148] sm:$0xff]
    %v110 = vld [vmem:[#allocation5 + $0x150] sm:$0xff]
    %v111 = vld [vmem:[#allocation5 + $0x158] sm:$0xff]
    %v112 = vld [vmem:[#allocation5 + $0x160] sm:$0xff]
    %v113 = vld [vmem:[#allocation5 + $0x168] sm:$0xff]
    %v114 = vld [vmem:[#allocation5 + $0x170] sm:$0xff]
    %v115 = vld [vmem:[#allocation5 + $0x178] sm:$0xff]
    %v116 = vld [vmem:[#allocation5 + $0x180] sm:$0xff]
    %v117 = vld [vmem:[#allocation5 + $0x188] sm:$0xff]
    %v118 = vld [vmem:[#allocation5 + $0x190] sm:$0xff]
    %v119 = vld [vmem:[#allocation5 + $0x198] sm:$0xff]
    %v120 = vld [vmem:[#allocation5 + $0x1a0] sm:$0xff]
    %v121 = vld [vmem:[#allocation5 + $0x1a8] sm:$0xff]
    %v122 = vld [vmem:[#allocation5 + $0x1b0] sm:$0xff]
    %v123 = vld [vmem:[#allocation5 + $0x1b8] sm:$0xff]
    %v124 = vld [vmem:[#allocation5 + $0x1c0] sm:$0xff]
    %v125 = vld [vmem:[#allocation5 + $0x1c8] sm:$0xff]
    %v126 = vld [vmem:[#allocation5 + $0x1d0] sm:$0xff]
    %v127 = vld [vmem:[#allocation5 + $0x1d8] sm:$0xff]
    %v128 = vld [vmem:[#allocation5 + $0x1e0] sm:$0xff]
    %v129 = vld [vmem:[#allocation5 + $0x1e8] sm:$0xff]
    %v130 = vld [vmem:[#allocation5 + $0x1f0] sm:$0xff]
    %v131 = vld [vmem:[#allocation5 + $0x1f8] sm:$0xff]
    %v132 = vld [vmem:[#allocation5 + $0x200] sm:$0xff]
    %v133 = vld [vmem:[#allocation5 + $0x208] sm:$0xff]
    %v134 = vld [vmem:[#allocation5 + $0x210] sm:$0xff]
    %v135 = vld [vmem:[#allocation5 + $0x218] sm:$0xff]
    %v136 = vld [vmem:[#allocation5 + $0x220] sm:$0xff]
    %v137 = vld [vmem:[#allocation5 + $0x228] sm:$0xff]
    %v138 = vld [vmem:[#allocation5 + $0x230] sm:$0xff]
    %v139 = vld [vmem:[#allocation5 + $0x238] sm:$0xff]
    %v140 = vld [vmem:[#allocation5 + $0x240] sm:$0xff]
    %v141 = vld [vmem:[#allocation5 + $0x248] sm:$0xff]
    %v142 = vld [vmem:[#allocation5 + $0x250] sm:$0xff]
    %v143 = vld [vmem:[#allocation5 + $0x258] sm:$0xff]
    %v144 = vld [vmem:[#allocation5 + $0x260] sm:$0xff]
    %v145 = vld [vmem:[#allocation5 + $0x268] sm:$0xff]
    %v146 = vld [vmem:[#allocation5 + $0x270] sm:$0xff]
    %v147 = vld [vmem:[#allocation5 + $0x278] sm:$0xff]
    %v148 = vld [vmem:[#allocation5 + $0x280] sm:$0xff]
    %v149 = vld [vmem:[#allocation5 + $0x288] sm:$0xff]
    %v150 = vld [vmem:[#allocation5 + $0x290] sm:$0xff]
    %v151 = vld [vmem:[#allocation5 + $0x298] sm:$0xff]
    %v152 = vld [vmem:[#allocation5 + $0x2a0] sm:$0xff]
    %v153 = vld [vmem:[#allocation5 + $0x2a8] sm:$0xff]
    %v154 = vld [vmem:[#allocation5 + $0x2b0] sm:$0xff]
    %v155 = vld [vmem:[#allocation5 + $0x2b8] sm:$0xff]
    %v156 = vld [vmem:[#allocation5 + $0x2c0] sm:$0xff]
    %v157 = vld [vmem:[#allocation5 + $0x2c8] sm:$0xff]
    %v158 = vld [vmem:[#allocation5 + $0x2d0] sm:$0xff]
    %v159 = vld [vmem:[#allocation5 + $0x2d8] sm:$0xff]
    %v160 = vld [vmem:[#allocation5 + $0x2e0] sm:$0xff]
    %v161 = vld [vmem:[#allocation5 + $0x2e8] sm:$0xff]
    %v162 = vld [vmem:[#allocation5 + $0x2f0] sm:$0xff]
    %v163 = vld [vmem:[#allocation5 + $0x2f8] sm:$0xff]
    %v164 = vld [vmem:[#allocation5 + $0x300] sm:$0xff]
    %v165 = vld [vmem:[#allocation5 + $0x308] sm:$0xff]
    %v166 = vld [vmem:[#allocation5 + $0x310] sm:$0xff]
    %v167 = vld [vmem:[#allocation5 + $0x318] sm:$0xff]
    %v168 = vld [vmem:[#allocation5 + $0x320] sm:$0xff]
    %v169 = vld [vmem:[#allocation5 + $0x328] sm:$0xff]
    %v170 = vld [vmem:[#allocation5 + $0x330] sm:$0xff]
    %v171 = vld [vmem:[#allocation5 + $0x338] sm:$0xff]
    %v172 = vld [vmem:[#allocation5 + $0x340] sm:$0xff]
    %v173 = vld [vmem:[#allocation5 + $0x348] sm:$0xff]
    %v174 = vld [vmem:[#allocation5 + $0x350] sm:$0xff]
    %v175 = vld [vmem:[#allocation5 + $0x358] sm:$0xff]
    %v176 = vld [vmem:[#allocation5 + $0x360] sm:$0xff]
    %v177 = vld [vmem:[#allocation5 + $0x368] sm:$0xff]
    %v178 = vld [vmem:[#allocation5 + $0x370] sm:$0xff]
    %v179 = vld [vmem:[#allocation5 + $0x378] sm:$0xff]
    %v180 = vld [vmem:[#allocation5 + $0x380] sm:$0xff]
    %v181 = vld [vmem:[#allocation5 + $0x388] sm:$0xff]
    %v182 = vld [vmem:[#allocation5 + $0x390] sm:$0xff]
    %v183 = vld [vmem:[#allocation5 + $0x398] sm:$0xff]
    %v184 = vld [vmem:[#allocation5 + $0x3a0] sm:$0xff]
    %v185 = vld [vmem:[#allocation5 + $0x3a8] sm:$0xff]
    %v186 = vld [vmem:[#allocation5 + $0x3b0] sm:$0xff]
    %v187 = vld [vmem:[#allocation5 + $0x3b8] sm:$0xff]
    %v188 = vld [vmem:[#allocation5 + $0x3c0] sm:$0xff]
    %v189 = vld [vmem:[#allocation5 + $0x3c8] sm:$0xff]
    %v190 = vld [vmem:[#allocation5 + $0x3d0] sm:$0xff]
    %v191 = vld [vmem:[#allocation5 + $0x3d8] sm:$0xff]
    %v192 = vld [vmem:[#allocation5 + $0x3e0] sm:$0xff]
    %v193 = vld [vmem:[#allocation5 + $0x3e8] sm:$0xff]
    %v194 = vld [vmem:[#allocation5 + $0x3f0] sm:$0xff]
    %v195 = vld [vmem:[#allocation5 + $0x3f8] sm:$0xff]
    %v196 = vld [vmem:[%s2] sm:$0x1]
    %v198 = vlaneseq
    %v199 = vshrl.u32 %v198, 7
    %v200 = vsub.s32 0, %v199
    %v201 = vrot.slane %v196, %v200
    %203 = vmatprep.subr.mxu0 0.0
    %204 = vmatpush1.msra.mxu0 %v68
    %205 = vmatprep.subr.mxu0 0.0
    %206 = vmatpush1.msra.mxu0 %v69
    %207 = vmatprep.subr.mxu0 0.0
    %208 = vmatpush1.msra.mxu0 %v70
    %209 = vmatprep.subr.mxu0 0.0
    %210 = vmatpush1.msra.mxu0 %v71
    %211 = vmatprep.subr.mxu0 0.0
    %212 = vmatpush1.msra.mxu0 %v72
    %213 = vmatprep.subr.mxu0 0.0
    %214 = vmatpush1.msra.mxu0 %v73
    %215 = vmatprep.subr.mxu0 0.0
    %216 = vmatpush1.msra.mxu0 %v74
    %217 = vmatprep.subr.mxu0 0.0
    %218 = vmatpush1.msra.mxu0 %v75
    %219 = vmatprep.subr.mxu0 0.0
    %220 = vmatpush1.msra.mxu0 %v76
    %221 = vmatprep.subr.mxu0 0.0
    %222 = vmatpush1.msra.mxu0 %v77
    %223 = vmatprep.subr.mxu0 0.0
    %224 = vmatpush1.msra.mxu0 %v78
    %225 = vmatprep.subr.mxu0 0.0
    %226 = vmatpush1.msra.mxu0 %v79
    %227 = vmatprep.subr.mxu0 0.0
    %228 = vmatpush1.msra.mxu0 %v80
    %229 = vmatprep.subr.mxu0 0.0
    %230 = vmatpush1.msra.mxu0 %v81
    %231 = vmatprep.subr.mxu0 0.0
    %232 = vmatpush1.msra.mxu0 %v82
    %233 = vmatprep.subr.mxu0 0.0
    %234 = vmatpush1.msra.mxu0 %v83
    %235 = vmatprep.subr.mxu0 0.0
    %236 = vmatpush1.msra.mxu0 %v84
    %237 = vmatprep.subr.mxu0 0.0
    %238 = vmatpush1.msra.mxu0 %v85
    %239 = vmatprep.subr.mxu0 0.0
    %240 = vmatpush1.msra.mxu0 %v86
    %241 = vmatprep.subr.mxu0 0.0
    %242 = vmatpush1.msra.mxu0 %v87
    %243 = vmatprep.subr.mxu0 0.0
    %244 = vmatpush1.msra.mxu0 %v88
    %245 = vmatprep.subr.mxu0 0.0
    %246 = vmatpush1.msra.mxu0 %v89
    %247 = vmatprep.subr.mxu0 0.0
    %248 = vmatpush1.msra.mxu0 %v90
    %249 = vmatprep.subr.mxu0 0.0
    %250 = vmatpush1.msra.mxu0 %v91
    %251 = vmatprep.subr.mxu0 0.0
    %252 = vmatpush1.msra.mxu0 %v92
    %253 = vmatprep.subr.mxu0 0.0
    %254 = vmatpush1.msra.mxu0 %v93
    %255 = vmatprep.subr.mxu0 0.0
    %256 = vmatpush1.msra.mxu0 %v94
    %257 = vmatprep.subr.mxu0 0.0
    %258 = vmatpush1.msra.mxu0 %v95
    %259 = vmatprep.subr.mxu0 0.0
    %260 = vmatpush1.msra.mxu0 %v96
    %261 = vmatprep.subr.mxu0 0.0
    %262 = vmatpush1.msra.mxu0 %v97
    %263 = vmatprep.subr.mxu0 0.0
    %264 = vmatpush1.msra.mxu0 %v98
    %265 = vmatprep.subr.mxu0 0.0
    %266 = vmatpush1.msra.mxu0 %v99
    %267 = vmatprep.mubr.f32.mxu0 %v61
    %268 = vmatmul.mubr.f32.gmra.mrb[0].mxu0 %v60
    %v269 = vpop.f32.mrb[0].mxu0
    %v270 = vadd.f32 %v201, %v269
    %v271 = vpop.f32.mrb[0].mxu0
    %272 = vdwg.mxu0
    %273 = vmatprep.subr.mxu0 0.0
    %274 = vmatpush1.msra.mxu0 %v100
    %275 = vmatprep.subr.mxu0 0.0
    %276 = vmatpush1.msra.mxu0 %v101
    %277 = vmatprep.subr.mxu0 0.0
    %278 = vmatpush1.msra.mxu0 %v102
    %279 = vmatprep.subr.mxu0 0.0
    %280 = vmatpush1.msra.mxu0 %v103
    %281 = vmatprep.subr.mxu0 0.0
    %282 = vmatpush1.msra.mxu0 %v104
    %283 = vmatprep.subr.mxu0 0.0
    %284 = vmatpush1.msra.mxu0 %v105
    %285 = vmatprep.subr.mxu0 0.0
    %286 = vmatpush1.msra.mxu0 %v106
    %287 = vmatprep.subr.mxu0 0.0
    %288 = vmatpush1.msra.mxu0 %v107
    %289 = vmatprep.subr.mxu0 0.0
    %290 = vmatpush1.msra.mxu0 %v108
    %291 = vmatprep.subr.mxu0 0.0
    %292 = vmatpush1.msra.mxu0 %v109
    %293 = vmatprep.subr.mxu0 0.0
    %294 = vmatpush1.msra.mxu0 %v110
    %295 = vmatprep.subr.mxu0 0.0
    %296 = vmatpush1.msra.mxu0 %v111
    %297 = vmatprep.subr.mxu0 0.0
    %298 = vmatpush1.msra.mxu0 %v112
    %299 = vmatprep.subr.mxu0 0.0
    %300 = vmatpush1.msra.mxu0 %v113
    %301 = vmatprep.subr.mxu0 0.0
    %302 = vmatpush1.msra.mxu0 %v114
    %303 = vmatprep.subr.mxu0 0.0
    %304 = vmatpush1.msra.mxu0 %v115
    %305 = vmatprep.subr.mxu0 0.0
    %306 = vmatpush1.msra.mxu0 %v116
    %307 = vmatprep.subr.mxu0 0.0
    %308 = vmatpush1.msra.mxu0 %v117
    %309 = vmatprep.subr.mxu0 0.0
    %310 = vmatpush1.msra.mxu0 %v118
    %311 = vmatprep.subr.mxu0 0.0
    %312 = vmatpush1.msra.mxu0 %v119
    %313 = vmatprep.subr.mxu0 0.0
    %314 = vmatpush1.msra.mxu0 %v120
    %315 = vmatprep.subr.mxu0 0.0
    %316 = vmatpush1.msra.mxu0 %v121
    %317 = vmatprep.subr.mxu0 0.0
    %318 = vmatpush1.msra.mxu0 %v122
    %319 = vmatprep.subr.mxu0 0.0
    %320 = vmatpush1.msra.mxu0 %v123
    %321 = vmatprep.subr.mxu0 0.0
    %322 = vmatpush1.msra.mxu0 %v124
    %323 = vmatprep.subr.mxu0 0.0
    %324 = vmatpush1.msra.mxu0 %v125
    %325 = vmatprep.subr.mxu0 0.0
    %326 = vmatpush1.msra.mxu0 %v126
    %327 = vmatprep.subr.mxu0 0.0
    %328 = vmatpush1.msra.mxu0 %v127
    %329 = vmatprep.subr.mxu0 0.0
    %330 = vmatpush1.msra.mxu0 %v128
    %331 = vmatprep.subr.mxu0 0.0
    %332 = vmatpush1.msra.mxu0 %v129
    %333 = vmatprep.subr.mxu0 0.0
    %334 = vmatpush1.msra.mxu0 %v130
    %335 = vmatprep.subr.mxu0 0.0
    %336 = vmatpush1.msra.mxu0 %v131
    %337 = vmatprep.mubr.f32.mxu0 %v63
    %338 = vmatmul.mubr.f32.gmra.mrb[0].mxu0 %v62
    %v339 = vpop.f32.mrb[0].mxu0
    %v340 = vadd.f32 %v270, %v339
    %v341 = vpop.f32.mrb[0].mxu0
    %342 = vdwg.mxu0
    %343 = vmatprep.subr.mxu0 0.0
    %344 = vmatpush1.msra.mxu0 %v132
    %345 = vmatprep.subr.mxu0 0.0
    %346 = vmatpush1.msra.mxu0 %v133
    %347 = vmatprep.subr.mxu0 0.0
    %348 = vmatpush1.msra.mxu0 %v134
    %349 = vmatprep.subr.mxu0 0.0
    %350 = vmatpush1.msra.mxu0 %v135
    %351 = vmatprep.subr.mxu0 0.0
    %352 = vmatpush1.msra.mxu0 %v136
    %353 = vmatprep.subr.mxu0 0.0
    %354 = vmatpush1.msra.mxu0 %v137
    %355 = vmatprep.subr.mxu0 0.0
    %356 = vmatpush1.msra.mxu0 %v138
    %357 = vmatprep.subr.mxu0 0.0
    %358 = vmatpush1.msra.mxu0 %v139
    %359 = vmatprep.subr.mxu0 0.0
    %360 = vmatpush1.msra.mxu0 %v140
    %361 = vmatprep.subr.mxu0 0.0
    %362 = vmatpush1.msra.mxu0 %v141
    %363 = vmatprep.subr.mxu0 0.0
    %364 = vmatpush1.msra.mxu0 %v142
    %365 = vmatprep.subr.mxu0 0.0
    %366 = vmatpush1.msra.mxu0 %v143
    %367 = vmatprep.subr.mxu0 0.0
    %368 = vmatpush1.msra.mxu0 %v144
    %369 = vmatprep.subr.mxu0 0.0
    %370 = vmatpush1.msra.mxu0 %v145
    %371 = vmatprep.subr.mxu0 0.0
    %372 = vmatpush1.msra.mxu0 %v146
    %373 = vmatprep.subr.mxu0 0.0
    %374 = vmatpush1.msra.mxu0 %v147
    %375 = vmatprep.subr.mxu0 0.0
    %376 = vmatpush1.msra.mxu0 %v148
    %377 = vmatprep.subr.mxu0 0.0
    %378 = vmatpush1.msra.mxu0 %v149
    %379 = vmatprep.subr.mxu0 0.0
    %380 = vmatpush1.msra.mxu0 %v150
    %381 = vmatprep.subr.mxu0 0.0
    %382 = vmatpush1.msra.mxu0 %v151
    %383 = vmatprep.subr.mxu0 0.0
    %384 = vmatpush1.msra.mxu0 %v152
    %385 = vmatprep.subr.mxu0 0.0
    %386 = vmatpush1.msra.mxu0 %v153
    %387 = vmatprep.subr.mxu0 0.0
    %388 = vmatpush1.msra.mxu0 %v154
    %389 = vmatprep.subr.mxu0 0.0
    %390 = vmatpush1.msra.mxu0 %v155
    %391 = vmatprep.subr.mxu0 0.0
    %392 = vmatpush1.msra.mxu0 %v156
    %393 = vmatprep.subr.mxu0 0.0
    %394 = vmatpush1.msra.mxu0 %v157
    %395 = vmatprep.subr.mxu0 0.0
    %396 = vmatpush1.msra.mxu0 %v158
    %397 = vmatprep.subr.mxu0 0.0
    %398 = vmatpush1.msra.mxu0 %v159
    %399 = vmatprep.subr.mxu0 0.0
    %400 = vmatpush1.msra.mxu0 %v160
    %401 = vmatprep.subr.mxu0 0.0
    %402 = vmatpush1.msra.mxu0 %v161
    %403 = vmatprep.subr.mxu0 0.0
    %404 = vmatpush1.msra.mxu0 %v162
    %405 = vmatprep.subr.mxu0 0.0
    %406 = vmatpush1.msra.mxu0 %v163
    %407 = vmatprep.mubr.f32.mxu0 %v65
    %408 = vmatmul.mubr.f32.gmra.mrb[0].mxu0 %v64
    %v409 = vpop.f32.mrb[0].mxu0
    %v410 = vadd.f32 %v340, %v409
    %v411 = vpop.f32.mrb[0].mxu0
    %412 = vdwg.mxu0
    %413 = vmatprep.subr.mxu0 0.0
    %414 = vmatpush1.msra.mxu0 %v164
    %415 = vmatprep.subr.mxu0 0.0
    %416 = vmatpush1.msra.mxu0 %v165
    %417 = vmatprep.subr.mxu0 0.0
    %418 = vmatpush1.msra.mxu0 %v166
    %419 = vmatprep.subr.mxu0 0.0
    %420 = vmatpush1.msra.mxu0 %v167
    %421 = vmatprep.subr.mxu0 0.0
    %422 = vmatpush1.msra.mxu0 %v168
    %423 = vmatprep.subr.mxu0 0.0
    %424 = vmatpush1.msra.mxu0 %v169
    %425 = vmatprep.subr.mxu0 0.0
    %426 = vmatpush1.msra.mxu0 %v170
    %427 = vmatprep.subr.mxu0 0.0
    %428 = vmatpush1.msra.mxu0 %v171
    %429 = vmatprep.subr.mxu0 0.0
    %430 = vmatpush1.msra.mxu0 %v172
    %431 = vmatprep.subr.mxu0 0.0
    %432 = vmatpush1.msra.mxu0 %v173
    %433 = vmatprep.subr.mxu0 0.0
    %434 = vmatpush1.msra.mxu0 %v174
    %435 = vmatprep.subr.mxu0 0.0
    %436 = vmatpush1.msra.mxu0 %v175
    %437 = vmatprep.subr.mxu0 0.0
    %438 = vmatpush1.msra.mxu0 %v176
    %439 = vmatprep.subr.mxu0 0.0
    %440 = vmatpush1.msra.mxu0 %v177
    %441 = vmatprep.subr.mxu0 0.0
    %442 = vmatpush1.msra.mxu0 %v178
    %443 = vmatprep.subr.mxu0 0.0
    %444 = vmatpush1.msra.mxu0 %v179
    %445 = vmatprep.subr.mxu0 0.0
    %446 = vmatpush1.msra.mxu0 %v180
    %447 = vmatprep.subr.mxu0 0.0
    %448 = vmatpush1.msra.mxu0 %v181
    %449 = vmatprep.subr.mxu0 0.0
    %450 = vmatpush1.msra.mxu0 %v182
    %451 = vmatprep.subr.mxu0 0.0
    %452 = vmatpush1.msra.mxu0 %v183
    %453 = vmatprep.subr.mxu0 0.0
    %454 = vmatpush1.msra.mxu0 %v184
    %455 = vmatprep.subr.mxu0 0.0
    %456 = vmatpush1.msra.mxu0 %v185
    %457 = vmatprep.subr.mxu0 0.0
    %458 = vmatpush1.msra.mxu0 %v186
    %459 = vmatprep.subr.mxu0 0.0
    %460 = vmatpush1.msra.mxu0 %v187
    %461 = vmatprep.subr.mxu0 0.0
    %462 = vmatpush1.msra.mxu0 %v188
    %463 = vmatprep.subr.mxu0 0.0
    %464 = vmatpush1.msra.mxu0 %v189
    %465 = vmatprep.subr.mxu0 0.0
    %466 = vmatpush1.msra.mxu0 %v190
    %467 = vmatprep.subr.mxu0 0.0
    %468 = vmatpush1.msra.mxu0 %v191
    %469 = vmatprep.subr.mxu0 0.0
    %470 = vmatpush1.msra.mxu0 %v192
    %471 = vmatprep.subr.mxu0 0.0
    %472 = vmatpush1.msra.mxu0 %v193
    %473 = vmatprep.subr.mxu0 0.0
    %474 = vmatpush1.msra.mxu0 %v194
    %475 = vmatprep.subr.mxu0 0.0
    %476 = vmatpush1.msra.mxu0 %v195
    %477 = vmatprep.mubr.f32.mxu0 %v67
    %478 = vmatmul.mubr.f32.gmra.mrb[0].mxu0 %v66
    %v479 = vpop.f32.mrb[0].mxu0
    %v480 = vadd.f32 %v410, %v479
    %v481 = vpop.f32.mrb[0].mxu0
    %482 = vdwg.mxu0
    %v483 = vmax.f32 %v480, 0.0
    %v484 = vld [vmem:[#allocation7] sm:$0xff]
    %v485 = vld [vmem:[#allocation7 + $0x8] sm:$0xff]
    %v486 = vld [vmem:[#allocation7 + $0x10] sm:$0xff]
    %v487 = vld [vmem:[#allocation7 + $0x18] sm:$0xff]
    %v488 = vld [vmem:[#allocation7 + $0x20] sm:$0xff]
    %v489 = vld [vmem:[#allocation7 + $0x28] sm:$0xff]
    %v490 = vld [vmem:[#allocation7 + $0x30] sm:$0xff]
    %v491 = vld [vmem:[#allocation7 + $0x38] sm:$0xff]
    %v492 = vld [vmem:[#allocation7 + $0x40] sm:$0xff]
    %v493 = vld [vmem:[#allocation7 + $0x48] sm:$0xff]
    %v494 = vld [vmem:[#allocation7 + $0x50] sm:$0xff]
    %v495 = vld [vmem:[#allocation7 + $0x58] sm:$0xff]
    %v496 = vld [vmem:[#allocation7 + $0x60] sm:$0xff]
    %v497 = vld [vmem:[#allocation7 + $0x68] sm:$0xff]
    %v498 = vld [vmem:[#allocation7 + $0x70] sm:$0xff]
    %v499 = vld [vmem:[#allocation7 + $0x78] sm:$0xff]
    %v500 = vld [vmem:[#allocation7 + $0x80] sm:$0xff]
    %v501 = vld [vmem:[#allocation7 + $0x88] sm:$0xff]
    %v502 = vld [vmem:[#allocation7 + $0x90] sm:$0xff]
    %v503 = vld [vmem:[#allocation7 + $0x98] sm:$0xff]
    %v504 = vld [vmem:[#allocation7 + $0xa0] sm:$0xff]
    %v505 = vld [vmem:[#allocation7 + $0xa8] sm:$0xff]
    %v506 = vld [vmem:[#allocation7 + $0xb0] sm:$0xff]
    %v507 = vld [vmem:[#allocation7 + $0xb8] sm:$0xff]
    %v508 = vld [vmem:[#allocation7 + $0xc0] sm:$0xff]
    %v509 = vld [vmem:[#allocation7 + $0xc8] sm:$0xff]
    %v510 = vld [vmem:[#allocation7 + $0xd0] sm:$0xff]
    %v511 = vld [vmem:[#allocation7 + $0xd8] sm:$0xff]
    %v512 = vld [vmem:[#allocation7 + $0xe0] sm:$0xff]
    %v513 = vld [vmem:[#allocation7 + $0xe8] sm:$0xff]
    %v514 = vld [vmem:[#allocation7 + $0xf0] sm:$0xff]
    %v515 = vld [vmem:[#allocation7 + $0xf8] sm:$0xff]
    %v516 = vld [vmem:[#allocation7 + $0x100] sm:$0xff]
    %v517 = vld [vmem:[#allocation7 + $0x108] sm:$0xff]
    %v518 = vld [vmem:[#allocation7 + $0x110] sm:$0xff]
    %v519 = vld [vmem:[#allocation7 + $0x118] sm:$0xff]
    %v520 = vld [vmem:[#allocation7 + $0x120] sm:$0xff]
    %v521 = vld [vmem:[#allocation7 + $0x128] sm:$0xff]
    %v522 = vld [vmem:[#allocation7 + $0x130] sm:$0xff]
    %v523 = vld [vmem:[#allocation7 + $0x138] sm:$0xff]
    %v524 = vld [vmem:[#allocation7 + $0x140] sm:$0xff]
    %v525 = vld [vmem:[#allocation7 + $0x148] sm:$0xff]
    %v526 = vld [vmem:[#allocation7 + $0x150] sm:$0xff]
    %v527 = vld [vmem:[#allocation7 + $0x158] sm:$0xff]
    %v528 = vld [vmem:[#allocation7 + $0x160] sm:$0xff]
    %v529 = vld [vmem:[#allocation7 + $0x168] sm:$0xff]
    %v530 = vld [vmem:[#allocation7 + $0x170] sm:$0xff]
    %v531 = vld [vmem:[#allocation7 + $0x178] sm:$0xff]
    %v532 = vld [vmem:[#allocation7 + $0x180] sm:$0xff]
    %v533 = vld [vmem:[#allocation7 + $0x188] sm:$0xff]
    %v534 = vld [vmem:[#allocation7 + $0x190] sm:$0xff]
    %v535 = vld [vmem:[#allocation7 + $0x198] sm:$0xff]
    %v536 = vld [vmem:[#allocation7 + $0x1a0] sm:$0xff]
    %v537 = vld [vmem:[#allocation7 + $0x1a8] sm:$0xff]
    %v538 = vld [vmem:[#allocation7 + $0x1b0] sm:$0xff]
    %v539 = vld [vmem:[#allocation7 + $0x1b8] sm:$0xff]
    %v540 = vld [vmem:[#allocation7 + $0x1c0] sm:$0xff]
    %v541 = vld [vmem:[#allocation7 + $0x1c8] sm:$0xff]
    %v542 = vld [vmem:[#allocation7 + $0x1d0] sm:$0xff]
    %v543 = vld [vmem:[#allocation7 + $0x1d8] sm:$0xff]
    %v544 = vld [vmem:[#allocation7 + $0x1e0] sm:$0xff]
    %v545 = vld [vmem:[#allocation7 + $0x1e8] sm:$0xff]
    %v546 = vld [vmem:[#allocation7 + $0x1f0] sm:$0xff]
    %v547 = vld [vmem:[#allocation7 + $0x1f8] sm:$0xff]
    %v548 = vld [vmem:[#allocation7 + $0x200] sm:$0xff]
    %v549 = vld [vmem:[#allocation7 + $0x208] sm:$0xff]
    %v550 = vld [vmem:[#allocation7 + $0x210] sm:$0xff]
    %v551 = vld [vmem:[#allocation7 + $0x218] sm:$0xff]
    %v552 = vld [vmem:[#allocation7 + $0x220] sm:$0xff]
    %v553 = vld [vmem:[#allocation7 + $0x228] sm:$0xff]
    %v554 = vld [vmem:[#allocation7 + $0x230] sm:$0xff]
    %v555 = vld [vmem:[#allocation7 + $0x238] sm:$0xff]
    %v556 = vld [vmem:[#allocation7 + $0x240] sm:$0xff]
    %v557 = vld [vmem:[#allocation7 + $0x248] sm:$0xff]
    %v558 = vld [vmem:[#allocation7 + $0x250] sm:$0xff]
    %v559 = vld [vmem:[#allocation7 + $0x258] sm:$0xff]
    %v560 = vld [vmem:[#allocation7 + $0x260] sm:$0xff]
    %v561 = vld [vmem:[#allocation7 + $0x268] sm:$0xff]
    %v562 = vld [vmem:[#allocation7 + $0x270] sm:$0xff]
    %v563 = vld [vmem:[#allocation7 + $0x278] sm:$0xff]
    %v564 = vld [vmem:[#allocation7 + $0x280] sm:$0xff]
    %v565 = vld [vmem:[#allocation7 + $0x288] sm:$0xff]
    %v566 = vld [vmem:[#allocation7 + $0x290] sm:$0xff]
    %v567 = vld [vmem:[#allocation7 + $0x298] sm:$0xff]
    %v568 = vld [vmem:[#allocation7 + $0x2a0] sm:$0xff]
    %v569 = vld [vmem:[#allocation7 + $0x2a8] sm:$0xff]
    %v570 = vld [vmem:[#allocation7 + $0x2b0] sm:$0xff]
    %v571 = vld [vmem:[#allocation7 + $0x2b8] sm:$0xff]
    %v572 = vld [vmem:[#allocation7 + $0x2c0] sm:$0xff]
    %v573 = vld [vmem:[#allocation7 + $0x2c8] sm:$0xff]
    %v574 = vld [vmem:[#allocation7 + $0x2d0] sm:$0xff]
    %v575 = vld [vmem:[#allocation7 + $0x2d8] sm:$0xff]
    %v576 = vld [vmem:[#allocation7 + $0x2e0] sm:$0xff]
    %v577 = vld [vmem:[#allocation7 + $0x2e8] sm:$0xff]
    %v578 = vld [vmem:[#allocation7 + $0x2f0] sm:$0xff]
    %v579 = vld [vmem:[#allocation7 + $0x2f8] sm:$0xff]
    %v580 = vld [vmem:[#allocation7 + $0x300] sm:$0xff]
    %v581 = vld [vmem:[#allocation7 + $0x308] sm:$0xff]
    %v582 = vld [vmem:[#allocation7 + $0x310] sm:$0xff]
    %v583 = vld [vmem:[#allocation7 + $0x318] sm:$0xff]
    %v584 = vld [vmem:[#allocation7 + $0x320] sm:$0xff]
    %v585 = vld [vmem:[#allocation7 + $0x328] sm:$0xff]
    %v586 = vld [vmem:[#allocation7 + $0x330] sm:$0xff]
    %v587 = vld [vmem:[#allocation7 + $0x338] sm:$0xff]
    %v588 = vld [vmem:[#allocation7 + $0x340] sm:$0xff]
    %v589 = vld [vmem:[#allocation7 + $0x348] sm:$0xff]
    %v590 = vld [vmem:[#allocation7 + $0x350] sm:$0xff]
    %v591 = vld [vmem:[#allocation7 + $0x358] sm:$0xff]
    %v592 = vld [vmem:[#allocation7 + $0x360] sm:$0xff]
    %v593 = vld [vmem:[#allocation7 + $0x368] sm:$0xff]
    %v594 = vld [vmem:[#allocation7 + $0x370] sm:$0xff]
    %v595 = vld [vmem:[#allocation7 + $0x378] sm:$0xff]
    %v596 = vld [vmem:[#allocation7 + $0x380] sm:$0xff]
    %v597 = vld [vmem:[#allocation7 + $0x388] sm:$0xff]
    %v598 = vld [vmem:[#allocation7 + $0x390] sm:$0xff]
    %v599 = vld [vmem:[#allocation7 + $0x398] sm:$0xff]
    %v600 = vld [vmem:[#allocation7 + $0x3a0] sm:$0xff]
    %v601 = vld [vmem:[#allocation7 + $0x3a8] sm:$0xff]
    %v602 = vld [vmem:[#allocation7 + $0x3b0] sm:$0xff]
    %v603 = vld [vmem:[#allocation7 + $0x3b8] sm:$0xff]
    %v604 = vld [vmem:[#allocation7 + $0x3c0] sm:$0xff]
    %v605 = vld [vmem:[#allocation7 + $0x3c8] sm:$0xff]
    %v606 = vld [vmem:[#allocation7 + $0x3d0] sm:$0xff]
    %v607 = vld [vmem:[#allocation7 + $0x3d8] sm:$0xff]
    %v608 = vld [vmem:[#allocation7 + $0x3e0] sm:$0xff]
    %v609 = vld [vmem:[#allocation7 + $0x3e8] sm:$0xff]
    %v610 = vld [vmem:[#allocation7 + $0x3f0] sm:$0xff]
    %v611 = vld [vmem:[#allocation7 + $0x3f8] sm:$0xff]
    %v612 = vld [vmem:[%s4] sm:$0xff]
    %v614 = vlaneseq
    %v615 = vshrl.u32 %v614, 7
    %v616 = vsub.s32 0, %v615
    %v617 = vrot.slane %v612, %v616
    %v618 = vlaneseq
    %v619 = vshrl.u32 %v618, 7
    %v620 = vsub.s32 1, %v619
    %v621 = vrot.slane %v612, %v620
    %v622 = vlaneseq
    %v623 = vshrl.u32 %v622, 7
    %v624 = vsub.s32 2, %v623
    %v625 = vrot.slane %v612, %v624
    %v626 = vlaneseq
    %v627 = vshrl.u32 %v626, 7
    %v628 = vsub.s32 3, %v627
    %v629 = vrot.slane %v612, %v628
    %v630 = vlaneseq
    %v631 = vshrl.u32 %v630, 7
    %v632 = vsub.s32 4, %v631
    %v633 = vrot.slane %v612, %v632
    %v634 = vlaneseq
    %v635 = vshrl.u32 %v634, 7
    %v636 = vsub.s32 5, %v635
    %v637 = vrot.slane %v612, %v636
    %v638 = vlaneseq
    %v639 = vshrl.u32 %v638, 7
    %v640 = vsub.s32 6, %v639
    %v641 = vrot.slane %v612, %v640
    %v642 = vlaneseq
    %v643 = vshrl.u32 %v642, 7
    %v644 = vsub.s32 7, %v643
    %v645 = vrot.slane %v612, %v644
    %654 = vmatprep.subr.mxu0 %v485
    %655 = vmatpush1.msra.mxu0 %v484
    %656 = vmatprep.subr.mxu0 %v493
    %657 = vmatpush1.msra.mxu0 %v492
    %658 = vmatprep.subr.mxu0 %v501
    %659 = vmatpush1.msra.mxu0 %v500
    %660 = vmatprep.subr.mxu0 %v509
    %661 = vmatpush1.msra.mxu0 %v508
    %662 = vmatprep.subr.mxu0 %v517
    %663 = vmatpush1.msra.mxu0 %v516
    %664 = vmatprep.subr.mxu0 %v525
    %665 = vmatpush1.msra.mxu0 %v524
    %666 = vmatprep.subr.mxu0 %v533
    %667 = vmatpush1.msra.mxu0 %v532
    %668 = vmatprep.subr.mxu0 %v541
    %669 = vmatpush1.msra.mxu0 %v540
    %670 = vmatprep.subr.mxu0 %v549
    %671 = vmatpush1.msra.mxu0 %v548
    %672 = vmatprep.subr.mxu0 %v557
    %673 = vmatpush1.msra.mxu0 %v556
    %674 = vmatprep.subr.mxu0 %v565
    %675 = vmatpush1.msra.mxu0 %v564
    %676 = vmatprep.subr.mxu0 %v573
    %677 = vmatpush1.msra.mxu0 %v572
    %678 = vmatprep.subr.mxu0 %v581
    %679 = vmatpush1.msra.mxu0 %v580
    %680 = vmatprep.subr.mxu0 %v589
    %681 = vmatpush1.msra.mxu0 %v588
    %682 = vmatprep.subr.mxu0 %v597
    %683 = vmatpush1.msra.mxu0 %v596
    %684 = vmatprep.subr.mxu0 %v605
    %685 = vmatpush1.msra.mxu0 %v604
    %686 = vmatprep.subr.mxu0 0.0
    %687 = vmatpush1.msra.mxu0 0.0
    %688 = vmatprep.subr.mxu0 0.0
    %689 = vmatpush1.msra.mxu0 0.0
    %690 = vmatprep.subr.mxu0 0.0
    %691 = vmatpush1.msra.mxu0 0.0
    %692 = vmatprep.subr.mxu0 0.0
    %693 = vmatpush1.msra.mxu0 0.0
    %694 = vmatprep.subr.mxu0 0.0
    %695 = vmatpush1.msra.mxu0 0.0
    %696 = vmatprep.subr.mxu0 0.0
    %697 = vmatpush1.msra.mxu0 0.0
    %698 = vmatprep.subr.mxu0 0.0
    %699 = vmatpush1.msra.mxu0 0.0
    %700 = vmatprep.subr.mxu0 0.0
    %701 = vmatpush1.msra.mxu0 0.0
    %702 = vmatprep.subr.mxu0 0.0
    %703 = vmatpush1.msra.mxu0 0.0
    %704 = vmatprep.subr.mxu0 0.0
    %705 = vmatpush1.msra.mxu0 0.0
    %706 = vmatprep.subr.mxu0 0.0
    %707 = vmatpush1.msra.mxu0 0.0
    %708 = vmatprep.subr.mxu0 0.0
    %709 = vmatpush1.msra.mxu0 0.0
    %710 = vmatprep.subr.mxu0 0.0
    %711 = vmatpush1.msra.mxu0 0.0
    %712 = vmatprep.subr.mxu0 0.0
    %713 = vmatpush1.msra.mxu0 0.0
    %714 = vmatprep.subr.mxu0 0.0
    %715 = vmatpush1.msra.mxu0 0.0
    %716 = vmatprep.subr.mxu0 0.0
    %717 = vmatpush1.msra.mxu0 0.0
    %718 = vmatprep.mubr.f32.mxu0 0.0
    %719 = vmatmul.mubr.f32.gmra.mrb[0].mxu0 %v483
    %v720 = vpop.f32.mrb[0].mxu0
    %v721 = vadd.f32 %v617, %v720
    %v722 = vpop.f32.mrb[0].mxu0
    %v723 = vadd.f32 %v621, %v722
    %724 = vdwg.mxu0
    %725 = vmatprep.subr.mxu0 %v487
    %726 = vmatpush1.msra.mxu0 %v486
    %727 = vmatprep.subr.mxu0 %v495
    %728 = vmatpush1.msra.mxu0 %v494
    %729 = vmatprep.subr.mxu0 %v503
    %730 = vmatpush1.msra.mxu0 %v502
    %731 = vmatprep.subr.mxu0 %v511
    %732 = vmatpush1.msra.mxu0 %v510
    %733 = vmatprep.subr.mxu0 %v519
    %734 = vmatpush1.msra.mxu0 %v518
    %735 = vmatprep.subr.mxu0 %v527
    %736 = vmatpush1.msra.mxu0 %v526
    %737 = vmatprep.subr.mxu0 %v535
    %738 = vmatpush1.msra.mxu0 %v534
    %739 = vmatprep.subr.mxu0 %v543
    %740 = vmatpush1.msra.mxu0 %v542
    %741 = vmatprep.subr.mxu0 %v551
    %742 = vmatpush1.msra.mxu0 %v550
    %743 = vmatprep.subr.mxu0 %v559
    %744 = vmatpush1.msra.mxu0 %v558
    %745 = vmatprep.subr.mxu0 %v567
    %746 = vmatpush1.msra.mxu0 %v566
    %747 = vmatprep.subr.mxu0 %v575
    %748 = vmatpush1.msra.mxu0 %v574
    %749 = vmatprep.subr.mxu0 %v583
    %750 = vmatpush1.msra.mxu0 %v582
    %751 = vmatprep.subr.mxu0 %v591
    %752 = vmatpush1.msra.mxu0 %v590
    %753 = vmatprep.subr.mxu0 %v599
    %754 = vmatpush1.msra.mxu0 %v598
    %755 = vmatprep.subr.mxu0 %v607
    %756 = vmatpush1.msra.mxu0 %v606
    %757 = vmatprep.subr.mxu0 0.0
    %758 = vmatpush1.msra.mxu0 0.0
    %759 = vmatprep.subr.mxu0 0.0
    %760 = vmatpush1.msra.mxu0 0.0
    %761 = vmatprep.subr.mxu0 0.0
    %762 = vmatpush1.msra.mxu0 0.0
    %763 = vmatprep.subr.mxu0 0.0
    %764 = vmatpush1.msra.mxu0 0.0
    %765 = vmatprep.subr.mxu0 0.0
    %766 = vmatpush1.msra.mxu0 0.0
    %767 = vmatprep.subr.mxu0 0.0
    %768 = vmatpush1.msra.mxu0 0.0
    %769 = vmatprep.subr.mxu0 0.0
    %770 = vmatpush1.msra.mxu0 0.0
    %771 = vmatprep.subr.mxu0 0.0
    %772 = vmatpush1.msra.mxu0 0.0
    %773 = vmatprep.subr.mxu0 0.0
    %774 = vmatpush1.msra.mxu0 0.0
    %775 = vmatprep.subr.mxu0 0.0
    %776 = vmatpush1.msra.mxu0 0.0
    %777 = vmatprep.subr.mxu0 0.0
    %778 = vmatpush1.msra.mxu0 0.0
    %779 = vmatprep.subr.mxu0 0.0
    %780 = vmatpush1.msra.mxu0 0.0
    %781 = vmatprep.subr.mxu0 0.0
    %782 = vmatpush1.msra.mxu0 0.0
    %783 = vmatprep.subr.mxu0 0.0
    %784 = vmatpush1.msra.mxu0 0.0
    %785 = vmatprep.subr.mxu0 0.0
    %786 = vmatpush1.msra.mxu0 0.0
    %787 = vmatprep.subr.mxu0 0.0
    %788 = vmatpush1.msra.mxu0 0.0
    %789 = vmatprep.mubr.f32.mxu0 0.0
    %790 = vmatmul.mubr.f32.gmra.mrb[0].mxu0 %v483
    %v791 = vpop.f32.mrb[0].mxu0
    %v792 = vadd.f32 %v625, %v791
    %v793 = vpop.f32.mrb[0].mxu0
    %v794 = vadd.f32 %v629, %v793
    %795 = vdwg.mxu0
    %796 = vmatprep.subr.mxu0 %v489
    %797 = vmatpush1.msra.mxu0 %v488
    %798 = vmatprep.subr.mxu0 %v497
    %799 = vmatpush1.msra.mxu0 %v496
    %800 = vmatprep.subr.mxu0 %v505
    %801 = vmatpush1.msra.mxu0 %v504
    %802 = vmatprep.subr.mxu0 %v513
    %803 = vmatpush1.msra.mxu0 %v512
    %804 = vmatprep.subr.mxu0 %v521
    %805 = vmatpush1.msra.mxu0 %v520
    %806 = vmatprep.subr.mxu0 %v529
    %807 = vmatpush1.msra.mxu0 %v528
    %808 = vmatprep.subr.mxu0 %v537
    %809 = vmatpush1.msra.mxu0 %v536
    %810 = vmatprep.subr.mxu0 %v545
    %811 = vmatpush1.msra.mxu0 %v544
    %812 = vmatprep.subr.mxu0 %v553
    %813 = vmatpush1.msra.mxu0 %v552
    %814 = vmatprep.subr.mxu0 %v561
    %815 = vmatpush1.msra.mxu0 %v560
    %816 = vmatprep.subr.mxu0 %v569
    %817 = vmatpush1.msra.mxu0 %v568
    %818 = vmatprep.subr.mxu0 %v577
    %819 = vmatpush1.msra.mxu0 %v576
    %820 = vmatprep.subr.mxu0 %v585
    %821 = vmatpush1.msra.mxu0 %v584
    %822 = vmatprep.subr.mxu0 %v593
    %823 = vmatpush1.msra.mxu0 %v592
    %824 = vmatprep.subr.mxu0 %v601
    %825 = vmatpush1.msra.mxu0 %v600
    %826 = vmatprep.subr.mxu0 %v609
    %827 = vmatpush1.msra.mxu0 %v608
    %828 = vmatprep.subr.mxu0 0.0
    %829 = vmatpush1.msra.mxu0 0.0
    %830 = vmatprep.subr.mxu0 0.0
    %831 = vmatpush1.msra.mxu0 0.0
    %832 = vmatprep.subr.mxu0 0.0
    %833 = vmatpush1.msra.mxu0 0.0
    %834 = vmatprep.subr.mxu0 0.0
    %835 = vmatpush1.msra.mxu0 0.0
    %836 = vmatprep.subr.mxu0 0.0
    %837 = vmatpush1.msra.mxu0 0.0
    %838 = vmatprep.subr.mxu0 0.0
    %839 = vmatpush1.msra.mxu0 0.0
    %840 = vmatprep.subr.mxu0 0.0
    %841 = vmatpush1.msra.mxu0 0.0
    %842 = vmatprep.subr.mxu0 0.0
    %843 = vmatpush1.msra.mxu0 0.0
    %844 = vmatprep.subr.mxu0 0.0
    %845 = vmatpush1.msra.mxu0 0.0
    %846 = vmatprep.subr.mxu0 0.0
    %847 = vmatpush1.msra.mxu0 0.0
    %848 = vmatprep.subr.mxu0 0.0
    %849 = vmatpush1.msra.mxu0 0.0
    %850 = vmatprep.subr.mxu0 0.0
    %851 = vmatpush1.msra.mxu0 0.0
    %852 = vmatprep.subr.mxu0 0.0
    %853 = vmatpush1.msra.mxu0 0.0
    %854 = vmatprep.subr.mxu0 0.0
    %855 = vmatpush1.msra.mxu0 0.0
    %856 = vmatprep.subr.mxu0 0.0
    %857 = vmatpush1.msra.mxu0 0.0
    %858 = vmatprep.subr.mxu0 0.0
    %859 = vmatpush1.msra.mxu0 0.0
    %860 = vmatprep.mubr.f32.mxu0 0.0
    %861 = vmatmul.mubr.f32.gmra.mrb[0].mxu0 %v483
    %v862 = vpop.f32.mrb[0].mxu0
    %v863 = vadd.f32 %v633, %v862
    %v864 = vpop.f32.mrb[0].mxu0
    %v865 = vadd.f32 %v637, %v864
    %866 = vdwg.mxu0
    %867 = vmatprep.subr.mxu0 %v491
    %868 = vmatpush1.msra.mxu0 %v490
    %869 = vmatprep.subr.mxu0 %v499
    %870 = vmatpush1.msra.mxu0 %v498
    %871 = vmatprep.subr.mxu0 %v507
    %872 = vmatpush1.msra.mxu0 %v506
    %873 = vmatprep.subr.mxu0 %v515
    %874 = vmatpush1.msra.mxu0 %v514
    %875 = vmatprep.subr.mxu0 %v523
    %876 = vmatpush1.msra.mxu0 %v522
    %877 = vmatprep.subr.mxu0 %v531
    %878 = vmatpush1.msra.mxu0 %v530
    %879 = vmatprep.subr.mxu0 %v539
    %880 = vmatpush1.msra.mxu0 %v538
    %881 = vmatprep.subr.mxu0 %v547
    %882 = vmatpush1.msra.mxu0 %v546
    %883 = vmatprep.subr.mxu0 %v555
    %884 = vmatpush1.msra.mxu0 %v554
    %885 = vmatprep.subr.mxu0 %v563
    %886 = vmatpush1.msra.mxu0 %v562
    %887 = vmatprep.subr.mxu0 %v571
    %888 = vmatpush1.msra.mxu0 %v570
    %889 = vmatprep.subr.mxu0 %v579
    %890 = vmatpush1.msra.mxu0 %v578
    %891 = vmatprep.subr.mxu0 %v587
    %892 = vmatpush1.msra.mxu0 %v586
    %893 = vmatprep.subr.mxu0 %v595
    %894 = vmatpush1.msra.mxu0 %v594
    %895 = vmatprep.subr.mxu0 %v603
    %896 = vmatpush1.msra.mxu0 %v602
    %897 = vmatprep.subr.mxu0 %v611
    %898 = vmatpush1.msra.mxu0 %v610
    %899 = vmatprep.subr.mxu0 0.0
    %900 = vmatpush1.msra.mxu0 0.0
    %901 = vmatprep.subr.mxu0 0.0
    %902 = vmatpush1.msra.mxu0 0.0
    %903 = vmatprep.subr.mxu0 0.0
    %904 = vmatpush1.msra.mxu0 0.0
    %905 = vmatprep.subr.mxu0 0.0
    %906 = vmatpush1.msra.mxu0 0.0
    %907 = vmatprep.subr.mxu0 0.0
    %908 = vmatpush1.msra.mxu0 0.0
    %909 = vmatprep.subr.mxu0 0.0
    %910 = vmatpush1.msra.mxu0 0.0
    %911 = vmatprep.subr.mxu0 0.0
    %912 = vmatpush1.msra.mxu0 0.0
    %913 = vmatprep.subr.mxu0 0.0
    %914 = vmatpush1.msra.mxu0 0.0
    %915 = vmatprep.subr.mxu0 0.0
    %916 = vmatpush1.msra.mxu0 0.0
    %917 = vmatprep.subr.mxu0 0.0
    %918 = vmatpush1.msra.mxu0 0.0
    %919 = vmatprep.subr.mxu0 0.0
    %920 = vmatpush1.msra.mxu0 0.0
    %921 = vmatprep.subr.mxu0 0.0
    %922 = vmatpush1.msra.mxu0 0.0
    %923 = vmatprep.subr.mxu0 0.0
    %924 = vmatpush1.msra.mxu0 0.0
    %925 = vmatprep.subr.mxu0 0.0
    %926 = vmatpush1.msra.mxu0 0.0
    %927 = vmatprep.subr.mxu0 0.0
    %928 = vmatpush1.msra.mxu0 0.0
    %929 = vmatprep.subr.mxu0 0.0
    %930 = vmatpush1.msra.mxu0 0.0
    %931 = vmatprep.mubr.f32.mxu0 0.0
    %932 = vmatmul.mubr.f32.gmra.mrb[0].mxu0 %v483
    %v933 = vpop.f32.mrb[0].mxu0
    %v934 = vadd.f32 %v641, %v933
    %v935 = vpop.f32.mrb[0].mxu0
    %v936 = vadd.f32 %v645, %v935
    %937 = vdwg.mxu0
    %938 = vst [vmem:[#allocation8] sm:$0xff] %v721
    %939 = vst [vmem:[#allocation8 + $0x8] sm:$0xff] %v723
    %940 = vst [vmem:[#allocation8 + $0x10] sm:$0xff] %v792
    %941 = vst [vmem:[#allocation8 + $0x18] sm:$0xff] %v794
    %942 = vst [vmem:[#allocation8 + $0x20] sm:$0xff] %v863
    %943 = vst [vmem:[#allocation8 + $0x28] sm:$0xff] %v865
    %944 = vst [vmem:[#allocation8 + $0x30] sm:$0xff] %v934
    %945 = vst [vmem:[#allocation8 + $0x38] sm:$0xff] %v936
    // Predicated region
    $region34: #{tpu_custom_call.1} parent=1 // pred_check
      _
    $region35: #{tpu_custom_call.1} parent=1 // pred_check_branch
      %947 = sbr.rel (0) target = $region37
    $region36: #{tpu_custom_call.1} parent=1 // pred_region
      %s949 = ssub.s32 1024, 1024
      %950 = vsyncadd [#allocation4], %s949
      %s952 = sshll.u32 [#allocation8], 4
      %s953 = int_to_ptr.vmem [resolvable:$true] %s952
      %955 = dma.vmem_to_hbm [thread:$0]  %s953, 1024, %s5, [#allocation4]
    $region37: #{tpu_custom_call.1} parent=1 // pred_fallthru
      _
    // Predicated region
    $region38: #{tpu_custom_call.1} parent=1 // pred_check
      _
    $region39: #{tpu_custom_call.1} parent=1 // pred_check_branch
      %957 = sbr.rel (0) target = $region41
    $region40: #{tpu_custom_call.1} parent=1 // pred_region
      %958 = dma.done [#allocation4], 1024
    $region41: #{tpu_custom_call.1} parent=1 // pred_fallthru
      _
    %959 = vsyncpa [#allocation3], 1
    %960 = vsyncpa [#allocation6], 1
    %961 = vsyncpa [#allocation4], 1

</llo_original>
